<compile_context>
chip_gen: v5e
topology: v5e:2x2
jax: 0.10.0
libtpu: 0.0.40
codegen_flags: <defaults>
</compile_context>

<pallas_src>
import functools

import jax
import jax.numpy as jnp
from jax.experimental import pallas as pl
from jax.experimental.pallas import tpu as pltpu


def _round_up(v: int, m: int) -> int:
    return ((v + m - 1) // m) * m


def _choose_batch_tile(batch: int, widths, act_budget_bytes: int = 4 * 1024 * 1024) -> int:
    """Pick a batch tile so the double-buffered input block plus the widest
    fp32 activation stays within a few MiB of VMEM (safe on v5e/v6e/v7x)."""
    padded = [_round_up(w, 128) for w in widths]
    bytes_per_row = 4 * (2 * padded[0] + 2 * max(padded))  # 2x input (dbl-buffer) + working activations
    tile = act_budget_bytes // max(bytes_per_row, 1)
    tile = max(8, min(1024, (tile // 8) * 8))
    if tile >= batch:
        return batch  # single full-batch block for small problems
    return tile       # multiple of 8; guarantees >= 2 grid steps for large batches


def _mlp_kernel(num_hidden, scal_ref, x_ref, *refs):
    # refs layout: [wT_0, b_0, scale_0, shift_0, ..., wT_{L-1}, b_{L-1},
    #               scale_{L-1}, shift_{L-1}, w_out_row, o_ref]
    o_ref = refs[-1]
    wout_ref = refs[-2]
    layer_refs = refs[:-2]

    h = x_ref[...].astype(jnp.float32)
    for l in range(num_hidden):
        wt_ref, b_ref, scale_ref, shift_ref = layer_refs[4 * l: 4 * l + 4]
        # Linear: x @ W.T + b   (weight passed pre-transposed as (din, dout))
        h = jnp.dot(h, wt_ref[...], preferred_element_type=jnp.float32) + b_ref[...]
        # BatchNorm1d (eval mode), folded to per-feature scale/shift
        h = h * scale_ref[...] + shift_ref[...]
        # PReLU with a single learnable parameter
        alpha = scal_ref[l]
        h = jnp.where(h >= 0.0, h, alpha * h)
        # Dropout: identity at inference.

    # Output Linear(d_last -> 1): elementwise mul + lane reduction instead of a
    # degenerate N=1 matmul.
    out = jnp.sum(h * wout_ref[...], axis=1, keepdims=True) + scal_ref[num_hidden]
    o_ref[...] = out.astype(o_ref.dtype)


def multilayer_perceptron(x: jax.Array, params: dict, *, eps: float = 1e-5,
                          batch_tile: int | None = None,
                          interpret: bool = False) -> jax.Array:
    """Pallas implementation of MultiLayerPerceptron.forward (inference)."""
    assert x.ndim == 2, "x must be (batch_size, input_dim)"
    b, d0 = x.shape

    weights = [w.astype(jnp.float32) for w in params["weights"]]   # (dout, din) PyTorch layout
    biases = [v.astype(jnp.float32) for v in params["biases"]]
    gammas = [v.astype(jnp.float32) for v in params["gamma"]]
    betas = [v.astype(jnp.float32) for v in params["beta"]]
    means = [v.astype(jnp.float32) for v in params["mean"]]
    vars_ = [v.astype(jnp.float32) for v in params["var"]]
    alphas = params["alpha"].astype(jnp.float32)                   # (num_hidden,)
    w_out = params["w_out"].astype(jnp.float32)                    # (1, d_last)
    b_out = jnp.reshape(params["b_out"], (1,)).astype(jnp.float32)

    num_hidden = len(weights)
    widths = [d0] + [w.shape[0] for w in weights]

    # --- batch tiling (VMEM-budget aware, padded to a tile multiple) ---------
    if batch_tile is None:
        batch_tile = _choose_batch_tile(b, widths)
    batch_tile = min(batch_tile, b) if batch_tile >= b else batch_tile
    if batch_tile < b and batch_tile % 8 != 0:
        batch_tile = max(8, (batch_tile // 8) * 8)
    b_pad = b if batch_tile >= b else _round_up(b, batch_tile)
    if batch_tile >= b:
        batch_tile = b
    x_pad = x if b_pad == b else jnp.pad(x, ((0, b_pad - b), (0, 0)))
    grid = (b_pad // batch_tile,)

    # --- prepare operands ----------------------------------------------------
    wts = [w.T for w in weights]                                   # (din, dout)
    brows = [bb.reshape(1, -1) for bb in biases]                   # (1, dout)
    scales, shifts = [], []
    for g, bt_, m, v in zip(gammas, betas, means, vars_):
        s = g / jnp.sqrt(v + eps)
        scales.append(s.reshape(1, -1))
        shifts.append((bt_ - m * s).reshape(1, -1))
    scal = jnp.concatenate([alphas.reshape(-1), b_out])            # SMEM scalars

    layer_ops = []
    in_specs = [
        pl.BlockSpec(memory_space=pltpu.MemorySpace.SMEM),         # scal (alphas + b_out)
        pl.BlockSpec((batch_tile, d0), lambda i: (i, 0)),          # x tile
    ]
    for l in range(num_hidden):
        din, dout = wts[l].shape
        layer_ops += [wts[l], brows[l], scales[l], shifts[l]]
        in_specs += [
            pl.BlockSpec((din, dout), lambda i: (0, 0)),           # weight, resident in VMEM
            pl.BlockSpec((1, dout), lambda i: (0, 0)),             # bias
            pl.BlockSpec((1, dout), lambda i: (0, 0)),             # BN scale
            pl.BlockSpec((1, dout), lambda i: (0, 0)),             # BN shift
        ]
    in_specs.append(pl.BlockSpec((1, widths[-1]), lambda i: (0, 0)))  # output-layer weight row

    out = pl.pallas_call(
        functools.partial(_mlp_kernel, num_hidden),
        out_shape=jax.ShapeDtypeStruct((b_pad, 1), jnp.float32),
        grid=grid,
        in_specs=in_specs,
        out_specs=pl.BlockSpec((batch_tile, 1), lambda i: (i, 0)),
        compiler_params=pltpu.CompilerParams(
            dimension_semantics=("parallel",),
            vmem_limit_bytes=32 * 1024 * 1024,
        ),
        interpret=interpret,
    )(scal, x_pad, *layer_ops, w_out)

    return out[:b]


def _mlp_reference(x: jax.Array, params: dict, eps: float = 1e-5) -> jax.Array:
    """Pure-JAX reference mirroring the PyTorch forward (eval mode)."""
    h = x.astype(jnp.float32)
    num_hidden = len(params["weights"])
    for l in range(num_hidden):
        w, b = params["weights"][l], params["biases"][l]
        g, beta = params["gamma"][l], params["beta"][l]
        mean, var = params["mean"][l], params["var"][l]
        a = params["alpha"][l]
        h = h @ w.T + b
        h = (h - mean) / jnp.sqrt(var + eps) * g + beta
        h = jnp.where(h >= 0.0, h, a * h)
    return h @ params["w_out"].T + params["b_out"]


def init_mlp_params(key, input_dim, embed_dims, prelu_init=0.8):
    params = {"weights": [], "biases": [], "gamma": [], "beta": [], "mean": [], "var": []}
    din = input_dim
    for dout in embed_dims:
        key, k1, k2, k3, k4, k5, k6 = jax.random.split(key, 7)
        params["weights"].append(jax.random.normal(k1, (dout, din), jnp.float32) / jnp.sqrt(din))
        params["biases"].append(0.1 * jax.random.normal(k2, (dout,), jnp.float32))
        params["gamma"].append(1.0 + 0.1 * jax.random.normal(k3, (dout,), jnp.float32))
        params["beta"].append(0.1 * jax.random.normal(k4, (dout,), jnp.float32))
        params["mean"].append(0.1 * jax.random.normal(k5, (dout,), jnp.float32))
        params["var"].append(0.5 + jax.random.uniform(k6, (dout,), jnp.float32))
        din = dout
    params["alpha"] = jnp.full((len(embed_dims),), prelu_init, jnp.float32)
    key, k1, k2 = jax.random.split(key, 3)
    params["w_out"] = jax.random.normal(k1, (1, din), jnp.float32) / jnp.sqrt(din)
    params["b_out"] = 0.1 * jax.random.normal(k2, (), jnp.float32)
    return params


if __name__ == "__main__":
    key = jax.random.PRNGKey(0)
    batch, input_dim = 2, 16
    embed_dims = (32, 32)

    kx, kp = jax.random.split(key)
    x = jax.random.normal(kx, (batch, input_dim), dtype=jnp.float32)
    params = init_mlp_params(kp, input_dim, embed_dims)

    out = multilayer_perceptron(x, params)
    out = jax.block_until_ready(out)

    ref = _mlp_reference(x, params)
    assert out.shape == (batch, 1), out.shape
    assert jnp.allclose(out, ref, atol=1e-4, rtol=1e-4), (out, ref)

    print("KERNEL_OK")
</pallas_src>

<mosaic_0001>
module attributes {stable_mosaic.version = 11 : i64} {
  func.func @_mlp_kernel(%arg0: i32, %arg1: memref<3xf32, #tpu.memory_space<smem>>, %arg2: memref<2x16xf32, #tpu.memory_space<vmem>>, %arg3: memref<16x32xf32, #tpu.memory_space<vmem>>, %arg4: memref<1x32xf32, #tpu.memory_space<vmem>>, %arg5: memref<1x32xf32, #tpu.memory_space<vmem>>, %arg6: memref<1x32xf32, #tpu.memory_space<vmem>>, %arg7: memref<32x32xf32, #tpu.memory_space<vmem>>, %arg8: memref<1x32xf32, #tpu.memory_space<vmem>>, %arg9: memref<1x32xf32, #tpu.memory_space<vmem>>, %arg10: memref<1x32xf32, #tpu.memory_space<vmem>>, %arg11: memref<1x32xf32, #tpu.memory_space<vmem>>, %arg12: memref<2x1xf32, #tpu.memory_space<vmem>>) attributes {dimension_semantics = [#tpu.dimension_semantics<parallel>], iteration_bounds = array<i64: 1>, scalar_prefetch = 0 : i64, scratch_operands = 0 : i64, tpu.core_type = #tpu.core_type<tc>, window_params = [{transform_indices = @transform_0, window_bounds = array<i64: 3>}, {transform_indices = @transform_1, window_bounds = array<i64: 2, 16>}, {pipeline_mode = #tpu.pipeline_mode<synchronous>, transform_indices = @transform_2, window_bounds = array<i64: 16, 32>}, {pipeline_mode = #tpu.pipeline_mode<synchronous>, transform_indices = @transform_3, window_bounds = array<i64: 1, 32>}, {pipeline_mode = #tpu.pipeline_mode<synchronous>, transform_indices = @transform_4, window_bounds = array<i64: 1, 32>}, {pipeline_mode = #tpu.pipeline_mode<synchronous>, transform_indices = @transform_5, window_bounds = array<i64: 1, 32>}, {pipeline_mode = #tpu.pipeline_mode<synchronous>, transform_indices = @transform_6, window_bounds = array<i64: 32, 32>}, {pipeline_mode = #tpu.pipeline_mode<synchronous>, transform_indices = @transform_7, window_bounds = array<i64: 1, 32>}, {pipeline_mode = #tpu.pipeline_mode<synchronous>, transform_indices = @transform_8, window_bounds = array<i64: 1, 32>}, {pipeline_mode = #tpu.pipeline_mode<synchronous>, transform_indices = @transform_9, window_bounds = array<i64: 1, 32>}, {pipeline_mode = #tpu.pipeline_mode<synchronous>, transform_indices = @transform_10, window_bounds = array<i64: 1, 32>}, {transform_indices = @transform_11, window_bounds = array<i64: 2, 1>}]} {
    %c0 = arith.constant 0 : index
    %c0_0 = arith.constant 0 : index
    %0 = vector.load %arg2[%c0, %c0_0] : memref<2x16xf32, #tpu.memory_space<vmem>>, vector<2x16xf32>
    %c0_1 = arith.constant 0 : index
    %c0_2 = arith.constant 0 : index
    %1 = vector.load %arg3[%c0_1, %c0_2] : memref<16x32xf32, #tpu.memory_space<vmem>>, vector<16x32xf32>
    %cst = arith.constant dense<0.000000e+00> : vector<2x32xf32>
    %2 = tpu.matmul %0, %1, %cst {dimension_numbers = #tpu.dot_dimension_numbers<[1], [0], [0], [1], [0, 0, 1, 1], [], []>} : vector<2x16xf32>, vector<16x32xf32>, vector<2x32xf32> -> vector<2x32xf32>
    %c0_3 = arith.constant 0 : index
    %c0_4 = arith.constant 0 : index
    %3 = vector.load %arg4[%c0_3, %c0_4] : memref<1x32xf32, #tpu.memory_space<vmem>>, vector<1x32xf32>
    %4 = vector.broadcast %3 : vector<1x32xf32> to vector<2x32xf32>
    %5 = arith.addf %2, %4 : vector<2x32xf32>
    %c0_5 = arith.constant 0 : index
    %c0_6 = arith.constant 0 : index
    %6 = vector.load %arg5[%c0_5, %c0_6] : memref<1x32xf32, #tpu.memory_space<vmem>>, vector<1x32xf32>
    %7 = vector.broadcast %6 : vector<1x32xf32> to vector<2x32xf32>
    %8 = arith.mulf %5, %7 : vector<2x32xf32>
    %c0_7 = arith.constant 0 : index
    %c0_8 = arith.constant 0 : index
    %9 = vector.load %arg6[%c0_7, %c0_8] : memref<1x32xf32, #tpu.memory_space<vmem>>, vector<1x32xf32>
    %10 = vector.broadcast %9 : vector<1x32xf32> to vector<2x32xf32>
    %11 = arith.addf %8, %10 : vector<2x32xf32>
    %c0_9 = arith.constant 0 : index
    %12 = memref.load %arg1[%c0_9] : memref<3xf32, #tpu.memory_space<smem>>
    %cst_10 = arith.constant 0.000000e+00 : f32
    %13 = vector.broadcast %cst_10 : f32 to vector<2x32xf32>
    %14 = arith.cmpf oge, %11, %13 : vector<2x32xf32>
    %15 = vector.broadcast %12 : f32 to vector<2x32xf32>
    %16 = arith.mulf %15, %11 : vector<2x32xf32>
    %17 = arith.select %14, %11, %16 : vector<2x32xi1>, vector<2x32xf32>
    %c0_11 = arith.constant 0 : index
    %c0_12 = arith.constant 0 : index
    %18 = vector.load %arg7[%c0_11, %c0_12] : memref<32x32xf32, #tpu.memory_space<vmem>>, vector<32x32xf32>
    %cst_13 = arith.constant dense<0.000000e+00> : vector<2x32xf32>
    %19 = tpu.matmul %17, %18, %cst_13 {dimension_numbers = #tpu.dot_dimension_numbers<[1], [0], [0], [1], [0, 0, 1, 1], [], []>} : vector<2x32xf32>, vector<32x32xf32>, vector<2x32xf32> -> vector<2x32xf32>
    %c0_14 = arith.constant 0 : index
    %c0_15 = arith.constant 0 : index
    %20 = vector.load %arg8[%c0_14, %c0_15] : memref<1x32xf32, #tpu.memory_space<vmem>>, vector<1x32xf32>
    %21 = vector.broadcast %20 : vector<1x32xf32> to vector<2x32xf32>
    %22 = arith.addf %19, %21 : vector<2x32xf32>
    %c0_16 = arith.constant 0 : index
    %c0_17 = arith.constant 0 : index
    %23 = vector.load %arg9[%c0_16, %c0_17] : memref<1x32xf32, #tpu.memory_space<vmem>>, vector<1x32xf32>
    %24 = vector.broadcast %23 : vector<1x32xf32> to vector<2x32xf32>
    %25 = arith.mulf %22, %24 : vector<2x32xf32>
    %c0_18 = arith.constant 0 : index
    %c0_19 = arith.constant 0 : index
    %26 = vector.load %arg10[%c0_18, %c0_19] : memref<1x32xf32, #tpu.memory_space<vmem>>, vector<1x32xf32>
    %27 = vector.broadcast %26 : vector<1x32xf32> to vector<2x32xf32>
    %28 = arith.addf %25, %27 : vector<2x32xf32>
    %c1 = arith.constant 1 : index
    %29 = memref.load %arg1[%c1] : memref<3xf32, #tpu.memory_space<smem>>
    %cst_20 = arith.constant 0.000000e+00 : f32
    %30 = vector.broadcast %cst_20 : f32 to vector<2x32xf32>
    %31 = arith.cmpf oge, %28, %30 : vector<2x32xf32>
    %32 = vector.broadcast %29 : f32 to vector<2x32xf32>
    %33 = arith.mulf %32, %28 : vector<2x32xf32>
    %34 = arith.select %31, %28, %33 : vector<2x32xi1>, vector<2x32xf32>
    %c0_21 = arith.constant 0 : index
    %c0_22 = arith.constant 0 : index
    %35 = vector.load %arg11[%c0_21, %c0_22] : memref<1x32xf32, #tpu.memory_space<vmem>>, vector<1x32xf32>
    %36 = vector.broadcast %35 : vector<1x32xf32> to vector<2x32xf32>
    %37 = arith.mulf %34, %36 : vector<2x32xf32>
    %cst_23 = arith.constant dense<0.000000e+00> : vector<2xf32>
    %38 = vector.multi_reduction <add>, %37, %cst_23 [1] : vector<2x32xf32> to vector<2xf32>
    %39 = vector.shape_cast %38 : vector<2xf32> to vector<2x1xf32>
    %c2 = arith.constant 2 : index
    %40 = memref.load %arg1[%c2] : memref<3xf32, #tpu.memory_space<smem>>
    %41 = vector.broadcast %40 : f32 to vector<2x1xf32>
    %42 = arith.addf %39, %41 : vector<2x1xf32>
    %c0_24 = arith.constant 0 : index
    %c0_25 = arith.constant 0 : index
    %43 = vector.load %arg12[%c0_24, %c0_25] : memref<2x1xf32, #tpu.memory_space<vmem>>, vector<2x1xf32>
    tpu.vector_store %arg12[%c0_24, %c0_25], %42 {strides = array<i32>} : memref<2x1xf32, #tpu.memory_space<vmem>>, vector<2x1xf32>,
    return
  }
  func.func @transform_0(%arg0: i32) -> i32 {
    %c0_i32 = arith.constant 0 : i32
    %c0_i32_0 = arith.constant 0 : i32
    return %c0_i32 : i32
  }
  func.func @transform_1(%arg0: i32) -> (i32, i32) {
    %c0_i32 = arith.constant 0 : i32
    %c0_i32_0 = arith.constant 0 : i32
    return %arg0, %c0_i32 : i32, i32
  }
  func.func @transform_2(%arg0: i32) -> (i32, i32) {
    %c0_i32 = arith.constant 0 : i32
    %c0_i32_0 = arith.constant 0 : i32
    %c0_i32_1 = arith.constant 0 : i32
    return %c0_i32, %c0_i32_0 : i32, i32
  }
  func.func @transform_3(%arg0: i32) -> (i32, i32) {
    %c0_i32 = arith.constant 0 : i32
    %c0_i32_0 = arith.constant 0 : i32
    %c0_i32_1 = arith.constant 0 : i32
    return %c0_i32, %c0_i32_0 : i32, i32
  }
  func.func @transform_4(%arg0: i32) -> (i32, i32) {
    %c0_i32 = arith.constant 0 : i32
    %c0_i32_0 = arith.constant 0 : i32
    %c0_i32_1 = arith.constant 0 : i32
    return %c0_i32, %c0_i32_0 : i32, i32
  }
  func.func @transform_5(%arg0: i32) -> (i32, i32) {
    %c0_i32 = arith.constant 0 : i32
    %c0_i32_0 = arith.constant 0 : i32
    %c0_i32_1 = arith.constant 0 : i32
    return %c0_i32, %c0_i32_0 : i32, i32
  }
  func.func @transform_6(%arg0: i32) -> (i32, i32) {
    %c0_i32 = arith.constant 0 : i32
    %c0_i32_0 = arith.constant 0 : i32
    %c0_i32_1 = arith.constant 0 : i32
    return %c0_i32, %c0_i32_0 : i32, i32
  }
  func.func @transform_7(%arg0: i32) -> (i32, i32) {
    %c0_i32 = arith.constant 0 : i32
    %c0_i32_0 = arith.constant 0 : i32
    %c0_i32_1 = arith.constant 0 : i32
    return %c0_i32, %c0_i32_0 : i32, i32
  }
  func.func @transform_8(%arg0: i32) -> (i32, i32) {
    %c0_i32 = arith.constant 0 : i32
    %c0_i32_0 = arith.constant 0 : i32
    %c0_i32_1 = arith.constant 0 : i32
    return %c0_i32, %c0_i32_0 : i32, i32
  }
  func.func @transform_9(%arg0: i32) -> (i32, i32) {
    %c0_i32 = arith.constant 0 : i32
    %c0_i32_0 = arith.constant 0 : i32
    %c0_i32_1 = arith.constant 0 : i32
    return %c0_i32, %c0_i32_0 : i32, i32
  }
  func.func @transform_10(%arg0: i32) -> (i32, i32) {
    %c0_i32 = arith.constant 0 : i32
    %c0_i32_0 = arith.constant 0 : i32
    %c0_i32_1 = arith.constant 0 : i32
    return %c0_i32, %c0_i32_0 : i32, i32
  }
  func.func @transform_11(%arg0: i32) -> (i32, i32) {
    %c0_i32 = arith.constant 0 : i32
    %c0_i32_0 = arith.constant 0 : i32
    return %arg0, %c0_i32 : i32, i32
  }
}

</mosaic_0001>

<llo_original>
// kernel: tpu_custom_call.1
$region0: #{tpu_custom_call.1}
  #allocation0 [shape = 'u32[]', space=smem, size = 0x4, offset = 0x4, fixed_abs, tag = 'smem constant byte address 0x4 - core index']
  #allocation1 [shape = 'u32[72,128]{1,0:T(1,128)}', space=vmem, size = 0x9000, scoped, tag = 'internal scratch']
  %s0 = inlined_call_operand.hbm [shape: f32[3], index: 0, kind: input, shape index: {}]
  %s1 = inlined_call_operand.hbm [shape: f32[2,16], index: 1, kind: input, shape index: {}]
  %s2 = inlined_call_operand.hbm [shape: f32[16,32], index: 2, kind: input, shape index: {}]
  %s3 = inlined_call_operand.vmem [shape: f32[1,32], index: 3, kind: input, shape index: {}]
  %s4 = inlined_call_operand.vmem [shape: f32[1,32], index: 4, kind: input, shape index: {}]
  %s5 = inlined_call_operand.vmem [shape: f32[1,32], index: 5, kind: input, shape index: {}]
  %s6 = inlined_call_operand.hbm [shape: f32[32,32], index: 6, kind: input, shape index: {}]
  %s7 = inlined_call_operand.vmem [shape: f32[1,32], index: 7, kind: input, shape index: {}]
  %s8 = inlined_call_operand.vmem [shape: f32[1,32], index: 8, kind: input, shape index: {}]
  %s9 = inlined_call_operand.vmem [shape: f32[1,32], index: 9, kind: input, shape index: {}]
  %s10 = inlined_call_operand.vmem [shape: f32[1,32], index: 10, kind: input, shape index: {}]
  %s11 = inlined_call_operand.vmem [shape: f32[2,1], index: 11, kind: output, shape index: {}]
  %s12 = sld [smem:[#allocation0]]
  $region70: #{tpu_custom_call.1} parent=0
    _
  %s14 = ssub.s32 1, %s12
  %s15 = scalar_select 0, %s14, %s12
  $region1: #{tpu_custom_call.1} parent=0
    #allocation2 [shape = 'u8[512]{0}', space=smem, size = 0x200, scoped, tag = 'input window, operand 0, single buffered']
    #allocation3 [shape = 's32[1]{0}', space=sflag, size = 0x4, scoped, tag = 'scoped memory for tpu_custom_call.1']
    #allocation4 [shape = 's32[1]{0}', space=sflag, size = 0x4, scoped, tag = 'scoped memory for tpu_custom_call.1']
    #allocation5 [shape = 'u8[1024]{0}', space=vmem, size = 0x400, scoped, tag = 'input window, operand 1, single buffered']
    #allocation6 [shape = 'u8[8192]{0}', space=vmem, size = 0x2000, scoped, tag = 'input window, operand 2, single buffered']
    #allocation7 [shape = 's32[1]{0}', space=sflag, size = 0x4, scoped, tag = 'scoped memory for tpu_custom_call.1']
    #allocation8 [shape = 'u8[16384]{0}', space=vmem, size = 0x4000, scoped, tag = 'input window, operand 6, single buffered']
    %16 = vsyncpa [#allocation4], 0
    %17 = vsyncpa [#allocation3], 0
    %18 = vsyncpa [#allocation7], 0
    // Predicated region
    $region2: #{tpu_custom_call.1} parent=1 // pred_check
      _
    $region3: #{tpu_custom_call.1} parent=1 // pred_check_branch
      %20 = sbr.rel (0) target = $region5
    $region4: #{tpu_custom_call.1} parent=1 // pred_region
      %22 = vsyncadd [#allocation4], 0
      %s24 = sshll.u32 %s0, 4
      %s25 = int_to_ptr.hbm [resolvable:$true] %s24
      %27 = dma.hbm_to_smem %s25, 16, [#allocation2], [#allocation4]
    $region5: #{tpu_custom_call.1} parent=1 // pred_fallthru
      _
    // Predicated region
    $region6: #{tpu_custom_call.1} parent=1 // pred_check
      _
    $region7: #{tpu_custom_call.1} parent=1 // pred_check_branch
      %29 = sbr.rel (0) target = $region9
    $region8: #{tpu_custom_call.1} parent=1 // pred_region
      %31 = vsyncadd [#allocation3], 0
      %s33 = sshll.u32 %s1, 4
      %s34 = int_to_ptr.hbm [resolvable:$true] %s33
      %s35 = sshll.u32 [#allocation5], 4
      %s36 = int_to_ptr.vmem [resolvable:$true] %s35
      %38 = dma.hbm_to_vmem [thread:$0]  %s34, 32, %s36, [#allocation3]
    $region9: #{tpu_custom_call.1} parent=1 // pred_fallthru
      _
    // Predicated region
    $region10: #{tpu_custom_call.1} parent=1 // pred_check
      _
    $region11: #{tpu_custom_call.1} parent=1 // pred_check_branch
      %40 = sbr.rel (0) target = $region13
    $region12: #{tpu_custom_call.1} parent=1 // pred_region
      %42 = vsyncadd [#allocation7], 0
      %s43 = sshll.u32 %s2, 4
      %s44 = int_to_ptr.hbm [resolvable:$true] %s43
      %s45 = sshll.u32 [#allocation6], 4
      %s46 = int_to_ptr.vmem [resolvable:$true] %s45
      %51 = dma.hbm_to_vmem [thread:$0]  %s44, 256, %s46, [#allocation7], 128, 128, 8
    $region13: #{tpu_custom_call.1} parent=1 // pred_fallthru
      _
    // Predicated region
    $region14: #{tpu_custom_call.1} parent=1 // pred_check
      _
    $region15: #{tpu_custom_call.1} parent=1 // pred_check_branch
      %53 = sbr.rel (0) target = $region17
    $region16: #{tpu_custom_call.1} parent=1 // pred_region
      _
    $region17: #{tpu_custom_call.1} parent=1 // pred_fallthru
      _
    // Predicated region
    $region18: #{tpu_custom_call.1} parent=1 // pred_check
      _
    $region19: #{tpu_custom_call.1} parent=1 // pred_check_branch
      %55 = sbr.rel (0) target = $region21
    $region20: #{tpu_custom_call.1} parent=1 // pred_region
      _
    $region21: #{tpu_custom_call.1} parent=1 // pred_fallthru
      _
    // Predicated region
    $region22: #{tpu_custom_call.1} parent=1 // pred_check
      _
    $region23: #{tpu_custom_call.1} parent=1 // pred_check_branch
      %57 = sbr.rel (0) target = $region25
    $region24: #{tpu_custom_call.1} parent=1 // pred_region
      _
    $region25: #{tpu_custom_call.1} parent=1 // pred_fallthru
      _
    // Predicated region
    $region26: #{tpu_custom_call.1} parent=1 // pred_check
      _
    $region27: #{tpu_custom_call.1} parent=1 // pred_check_branch
      %59 = sbr.rel (0) target = $region29
    $region28: #{tpu_custom_call.1} parent=1 // pred_region
      %61 = vsyncadd [#allocation7], 0
      %s62 = sshll.u32 %s6, 4
      %s63 = int_to_ptr.hbm [resolvable:$true] %s62
      %s64 = sshll.u32 [#allocation8], 4
      %s65 = int_to_ptr.vmem [resolvable:$true] %s64
      %70 = dma.hbm_to_vmem [thread:$0]  %s63, 512, %s65, [#allocation7], 128, 128, 8
    $region29: #{tpu_custom_call.1} parent=1 // pred_fallthru
      _
    // Predicated region
    $region30: #{tpu_custom_call.1} parent=1 // pred_check
      _
    $region31: #{tpu_custom_call.1} parent=1 // pred_check_branch
      %72 = sbr.rel (0) target = $region33
    $region32: #{tpu_custom_call.1} parent=1 // pred_region
      _
    $region33: #{tpu_custom_call.1} parent=1 // pred_fallthru
      _
    // Predicated region
    $region34: #{tpu_custom_call.1} parent=1 // pred_check
      _
    $region35: #{tpu_custom_call.1} parent=1 // pred_check_branch
      %74 = sbr.rel (0) target = $region37
    $region36: #{tpu_custom_call.1} parent=1 // pred_region
      _
    $region37: #{tpu_custom_call.1} parent=1 // pred_fallthru
      _
    // Predicated region
    $region38: #{tpu_custom_call.1} parent=1 // pred_check
      _
    $region39: #{tpu_custom_call.1} parent=1 // pred_check_branch
      %76 = sbr.rel (0) target = $region41
    $region40: #{tpu_custom_call.1} parent=1 // pred_region
      _
    $region41: #{tpu_custom_call.1} parent=1 // pred_fallthru
      _
    // Predicated region
    $region42: #{tpu_custom_call.1} parent=1 // pred_check
      _
    $region43: #{tpu_custom_call.1} parent=1 // pred_check_branch
      %78 = sbr.rel (0) target = $region45
    $region44: #{tpu_custom_call.1} parent=1 // pred_region
      _
    $region45: #{tpu_custom_call.1} parent=1 // pred_fallthru
      _
    // Predicated region
    $region46: #{tpu_custom_call.1} parent=1 // pred_check
      _
    $region47: #{tpu_custom_call.1} parent=1 // pred_check_branch
      %80 = sbr.rel (0) target = $region49
    $region48: #{tpu_custom_call.1} parent=1 // pred_region
      %82 = dma.done [#allocation4], 16
    $region49: #{tpu_custom_call.1} parent=1 // pred_fallthru
      _
    // Predicated region
    $region50: #{tpu_custom_call.1} parent=1 // pred_check
      _
    $region51: #{tpu_custom_call.1} parent=1 // pred_check_branch
      %84 = sbr.rel (0) target = $region53
    $region52: #{tpu_custom_call.1} parent=1 // pred_region
      %86 = dma.done [#allocation3], 32
    $region53: #{tpu_custom_call.1} parent=1 // pred_fallthru
      _
    // Predicated region
    $region54: #{tpu_custom_call.1} parent=1 // pred_check
      _
    $region55: #{tpu_custom_call.1} parent=1 // pred_check_branch
      %88 = sbr.rel (0) target = $region57
    $region56: #{tpu_custom_call.1} parent=1 // pred_region
      %90 = dma.done [#allocation7], 256
    $region57: #{tpu_custom_call.1} parent=1 // pred_fallthru
      _
    // Predicated region
    $region58: #{tpu_custom_call.1} parent=1 // pred_check
      _
    $region59: #{tpu_custom_call.1} parent=1 // pred_check_branch
      %92 = sbr.rel (0) target = $region61
    $region60: #{tpu_custom_call.1} parent=1 // pred_region
      %94 = dma.done [#allocation7], 512
    $region61: #{tpu_custom_call.1} parent=1 // pred_fallthru
      _
    %95 = sfence
    %v96 = vld [vmem:[#allocation5] sm:$0x3]
    %v97 = vld [vmem:[#allocation6] sm:$0xff]
    %v98 = vld [vmem:[#allocation6 + $0x8] sm:$0xff]
    %v99 = vld [vmem:[%s3] sm:$0x1]
    %v101 = vperm.slane %v99, 0
    %vm103 = vcmask 130048
    %v105 = vsel %vm103, %v96, 0
    %107 = vmatpush.msra.mxu0 0.0
    %108 = vmatpush.msra.mxu0 0.0
    %109 = vmatpush.msra.mxu0 0.0
    %110 = vmatpush.msra.mxu0 0.0
    %111 = vmatpush.msra.mxu0 0.0
    %112 = vmatpush.msra.mxu0 0.0
    %113 = vmatpush.msra.mxu0 0.0
    %114 = vmatpush.msra.mxu0 0.0
    %115 = vmatpush.msra.mxu0 0.0
    %116 = vmatpush.msra.mxu0 0.0
    %117 = vmatpush.msra.mxu0 0.0
    %118 = vmatpush.msra.mxu0 0.0
    %119 = vmatpush.msra.mxu0 0.0
    %120 = vmatpush.msra.mxu0 0.0
    %121 = vmatpush.msra.mxu0 %v98
    %122 = vmatpush.msra.mxu0 %v97
    %123 = vmatmul.f32.gmra.mxu0 %v105
    %v124 = vpop.f32.mrf.mxu0
    %v125 = vadd.f32 %v101, %v124
    %126 = vdwg.mxu0
    %v127 = vld [vmem:[%s4] sm:$0x1]
    %v129 = vperm.slane %v127, 0
    %v131 = vmul.f32 %v125, %v129
    %v132 = vld [vmem:[%s5] sm:$0x1]
    %v134 = vperm.slane %v132, 0
    %v136 = vadd.f32 %v131, %v134
    %s137 = sld [smem:[#allocation2]]
    %vm138 = vcmp.ge.f32.partialorder %v136, 0.0
    %v139 = vstv %s137
    %v140 = vmul.f32 %v139, %v136
    %v141 = vsel %vm138, %v136, %v140
    %v142 = vld [vmem:[#allocation8] sm:$0xff]
    %v143 = vld [vmem:[#allocation8 + $0x8] sm:$0xff]
    %v144 = vld [vmem:[#allocation8 + $0x10] sm:$0xff]
    %v145 = vld [vmem:[#allocation8 + $0x18] sm:$0xff]
    %v146 = vld [vmem:[%s7] sm:$0x1]
    %v148 = vperm.slane %v146, 0
    %vm150 = vcmask 261120
    %v152 = vsel %vm150, %v141, 0
    %154 = vmatpush.msra.mxu0 0.0
    %155 = vmatpush.msra.mxu0 0.0
    %156 = vmatpush.msra.mxu0 0.0
    %157 = vmatpush.msra.mxu0 0.0
    %158 = vmatpush.msra.mxu0 0.0
    %159 = vmatpush.msra.mxu0 0.0
    %160 = vmatpush.msra.mxu0 0.0
    %161 = vmatpush.msra.mxu0 0.0
    %162 = vmatpush.msra.mxu0 0.0
    %163 = vmatpush.msra.mxu0 0.0
    %164 = vmatpush.msra.mxu0 0.0
    %165 = vmatpush.msra.mxu0 0.0
    %166 = vmatpush.msra.mxu0 %v145
    %167 = vmatpush.msra.mxu0 %v144
    %168 = vmatpush.msra.mxu0 %v143
    %169 = vmatpush.msra.mxu0 %v142
    %170 = vmatmul.f32.gmra.mxu0 %v152
    %v171 = vpop.f32.mrf.mxu0
    %v172 = vadd.f32 %v148, %v171
    %173 = vdwg.mxu0
    %v174 = vld [vmem:[%s8] sm:$0x1]
    %v176 = vperm.slane %v174, 0
    %v178 = vmul.f32 %v172, %v176
    %v179 = vld [vmem:[%s9] sm:$0x1]
    %v181 = vperm.slane %v179, 0
    %v183 = vadd.f32 %v178, %v181
    %s184 = sld [smem:[#allocation2 + $0x1]]
    %vm185 = vcmp.ge.f32.partialorder %v183, 0.0
    %v186 = vstv %s184
    %v187 = vmul.f32 %v186, %v183
    %v188 = vsel %vm185, %v183, %v187
    %v189 = vld [vmem:[%s10] sm:$0x1]
    %v191 = vperm.slane %v189, 0
    %v193 = vmul.f32 %v188, %v191
    %vm194 = vcmask 254976
    %v195 = vsel %vm194, %v193, 0.0
    %196 = vadd.xlane.f32.xlu0 %v195
    %v197 = vpop.xlane.xlu0 %196
    %s198 = sld [smem:[#allocation2 + $0x2]]
    %v199 = vstv %s198
    %v200 = vadd.f32 %v197, %v199
    %vm201 = vcmask 1024
    %202 = vst.msk [vmem:[%s11] sm:$0x3] %vm201, %v200
    // Predicated region
    $region62: #{tpu_custom_call.1} parent=1 // pred_check
      _
    $region63: #{tpu_custom_call.1} parent=1 // pred_check_branch
      %204 = sbr.rel (0) target = $region65
    $region64: #{tpu_custom_call.1} parent=1 // pred_region
      _
    $region65: #{tpu_custom_call.1} parent=1 // pred_fallthru
      _
    // Predicated region
    $region66: #{tpu_custom_call.1} parent=1 // pred_check
      _
    $region67: #{tpu_custom_call.1} parent=1 // pred_check_branch
      %206 = sbr.rel (0) target = $region69
    $region68: #{tpu_custom_call.1} parent=1 // pred_region
      _
    $region69: #{tpu_custom_call.1} parent=1 // pred_fallthru
      _
    %207 = vsyncpa [#allocation3], 1
    %208 = vsyncpa [#allocation7], 1
    %209 = vsyncpa [#allocation4], 1

</llo_original>
